<compile_context>
chip_gen: v6e
topology: v6e:2x2x1
jax: 0.10.0
libtpu: 0.0.40
codegen_flags: <defaults>
</compile_context>

<pallas_src>
import jax
import jax.numpy as jnp
from jax.experimental import pallas as pl
from jax.experimental.pallas import tpu as pltpu


NB_FEATURES = 7            # pclass, sex, age, sibsp, parch, fare, embarked
NB_HIDDEN = 7              # nb_neurons_intermediate_layer
NB_INTERMEDIATE = 3        # nb_intermediate_layers
NB_CLASSES = 2             # nb_classes (the 2-class head-fold relies on this)
NB_LAYERS = NB_INTERMEDIATE + 2   # input + intermediates + output
PAD_DIM = 8                # features/hidden padded to one sublane group
TB_CAP = 4096              # max batch-tile (lanes); VMEM use stays tiny


def _round_up(x, m):
    return (x + m - 1) // m * m


def _titanic_mlp_kernel(x_ref, w_ref, out_ref):
    """One batch tile of the full MLP forward.

    x_ref   : [PAD_DIM, TB]   activations, batch on lanes; row 7 == 1.0
              (homogeneous coordinate carrying the biases)
    w_ref   : [NB_LAYERS, PAD_DIM, PAD_DIM] packed weights [layer, out, in]
              (bias in column 7, w[l,7,7] = 1 keeps the homogeneous row alive;
               last layer holds the 2-class logit-difference in row 0)
    out_ref : [NB_CLASSES, TB] class probabilities, batch on lanes
    """
    h = x_ref[...]                                            # [8, TB] f32

    # input layer + 3 intermediate layers, all with ReLU (static unroll).
    # Row 7 stays exactly 1.0 through every layer (w[l,7,7]=1, ReLU(1)=1),
    # so the bias column is applied for free by the matmul.
    for l in range(NB_LAYERS - 1):
        h = jnp.maximum(
            jnp.dot(w_ref[l], h, preferred_element_type=jnp.float32), 0.0)

    # output layer: row 0 holds the folded logit difference l0 - l1.
    d = jnp.dot(w_ref[NB_LAYERS - 1], h,
                preferred_element_type=jnp.float32)           # [8, TB]

    # 2-class softmax == sigmoid of the logit difference (exact identity).
    p0 = jax.nn.sigmoid(d[0:1, :])                            # [1, TB], EUP
    out_ref[0:1, :] = p0
    out_ref[1:2, :] = 1.0 - p0


def pack_params(params):
    """Pack the 10 PyTorch-layout ([out,in] / [out]) tensors into one slab.

    Biases are folded into column 7 (homogeneous coordinate); the 2-class
    output head is folded into a single logit-difference row.
    """
    assert NB_CLASSES == 2, "head-fold pack assumes 2 classes"
    w_packed = jnp.zeros((NB_LAYERS, PAD_DIM, PAD_DIM), jnp.float32)

    hidden = [("w_in", "b_in"), ("w_i0", "b_i0"),
              ("w_i1", "b_i1"), ("w_i2", "b_i2")]
    for l, (wn, bn) in enumerate(hidden):
        w = params[wn].astype(jnp.float32)
        b = params[bn].astype(jnp.float32)
        o, i = w.shape
        w_packed = w_packed.at[l, :o, :i].set(w)
        w_packed = w_packed.at[l, :o, PAD_DIM - 1].set(b)          # bias col
        w_packed = w_packed.at[l, PAD_DIM - 1, PAD_DIM - 1].set(1.0)  # carry 1

    w_out = params["w_out"].astype(jnp.float32)                    # [2, 7]
    b_out = params["b_out"].astype(jnp.float32)                    # [2]
    last = NB_LAYERS - 1
    w_packed = w_packed.at[last, 0, :NB_HIDDEN].set(w_out[0] - w_out[1])
    w_packed = w_packed.at[last, 0, PAD_DIM - 1].set(b_out[0] - b_out[1])
    return w_packed


def titanic_forward(pclass, sex, age, sibsp, parch, fare, embarked, w_packed):
    """Reproduces ModelTitanic.forward; returns [batch, nb_classes] probs."""
    feats = (pclass, sex, age, sibsp, parch, fare, embarked)
    batch = pclass.shape[0]

    # Build [8, batch] in one shot: 7 feature rows + homogeneous ones row.
    rows = [f.reshape(1, batch).astype(jnp.float32) for f in feats]
    rows.append(jnp.ones((1, batch), jnp.float32))
    x = jnp.concatenate(rows, axis=0)                          # [8, batch]

    # Batch tile: multiple of 128 lanes, aim for >=2 grid steps (both v7x
    # TensorCores busy) but cap at TB_CAP to bound per-tile VMEM.
    padded_b = _round_up(batch, 128)
    tb = min(TB_CAP, _round_up(pl.cdiv(padded_b, 2), 128))
    padded_b = _round_up(padded_b, tb)
    if padded_b != batch:
        x = jnp.pad(x, ((0, 0), (0, padded_b - batch)))

    out_t = pl.pallas_call(
        _titanic_mlp_kernel,
        out_shape=jax.ShapeDtypeStruct((NB_CLASSES, padded_b), jnp.float32),
        grid=(padded_b // tb,),
        in_specs=[
            pl.BlockSpec((PAD_DIM, tb), lambda i: (0, i)),
            pl.BlockSpec((NB_LAYERS, PAD_DIM, PAD_DIM), lambda i: (0, 0, 0)),
        ],
        out_specs=pl.BlockSpec((NB_CLASSES, tb), lambda i: (0, i)),
        compiler_params=pltpu.CompilerParams(
            dimension_semantics=("parallel",)),
    )(x, w_packed)

    # Back to the PyTorch output layout: [batch, nb_classes].
    return out_t[:, :batch].T


def init_params(key):
    """Deterministic init; weights stored PyTorch-style as [out, in]."""
    keys = jax.random.split(key, 10)

    def linear(kw, kb, fan_in, fan_out):
        bound = 1.0 / jnp.sqrt(jnp.float32(fan_in))
        w = jax.random.uniform(kw, (fan_out, fan_in), jnp.float32, -bound, bound)
        b = jax.random.uniform(kb, (fan_out,), jnp.float32, -bound, bound)
        return w, b

    w_in, b_in = linear(keys[0], keys[1], NB_FEATURES, NB_HIDDEN)
    w_i0, b_i0 = linear(keys[2], keys[3], NB_HIDDEN, NB_HIDDEN)
    w_i1, b_i1 = linear(keys[4], keys[5], NB_HIDDEN, NB_HIDDEN)
    w_i2, b_i2 = linear(keys[6], keys[7], NB_HIDDEN, NB_HIDDEN)
    w_out, b_out = linear(keys[8], keys[9], NB_HIDDEN, NB_CLASSES)

    return {
        "w_in": w_in, "b_in": b_in,
        "w_i0": w_i0, "b_i0": b_i0,
        "w_i1": w_i1, "b_i1": b_i1,
        "w_i2": w_i2, "b_i2": b_i2,
        "w_out": w_out, "b_out": b_out,
    }


def _reference_forward(pclass, sex, age, sibsp, parch, fare, embarked, params):
    """Pure-JAX reference for correctness check (PyTorch semantics)."""
    x = jnp.concatenate(
        [pclass, sex, age, sibsp, parch, fare, embarked], axis=1
    ).astype(jnp.float32)
    h = jax.nn.relu(x @ params["w_in"].T + params["b_in"])
    h = jax.nn.relu(h @ params["w_i0"].T + params["b_i0"])
    h = jax.nn.relu(h @ params["w_i1"].T + params["b_i1"])
    h = jax.nn.relu(h @ params["w_i2"].T + params["b_i2"])
    logits = h @ params["w_out"].T + params["b_out"]
    return jax.nn.softmax(logits, axis=1)


# TODO(synk): compute_loss / batch (training step with optimizer) are not part
# of the forward pass and are intentionally not implemented as kernels.

if __name__ == "__main__":
    key = jax.random.PRNGKey(0)
    k_param, k_data = jax.random.split(key)

    params = init_params(k_param)
    w_packed = pack_params(params)

    batch = 8
    dks = jax.random.split(k_data, 7)
    # Titanic-like feature columns, each [batch, 1]
    pclass = jax.random.randint(dks[0], (batch, 1), 1, 4).astype(jnp.float32)
    sex = jax.random.randint(dks[1], (batch, 1), 0, 2).astype(jnp.float32)
    age = jax.random.uniform(dks[2], (batch, 1), jnp.float32, 1.0, 80.0)
    sibsp = jax.random.randint(dks[3], (batch, 1), 0, 5).astype(jnp.float32)
    parch = jax.random.randint(dks[4], (batch, 1), 0, 4).astype(jnp.float32)
    fare = jax.random.uniform(dks[5], (batch, 1), jnp.float32, 5.0, 100.0)
    embarked = jax.random.randint(dks[6], (batch, 1), 0, 3).astype(jnp.float32)

    out = titanic_forward(pclass, sex, age, sibsp, parch, fare, embarked,
                          w_packed)
    out = jax.block_until_ready(out)

    ref = _reference_forward(
        pclass, sex, age, sibsp, parch, fare, embarked, params
    )

    assert out.shape == (batch, NB_CLASSES)
    assert jnp.allclose(out, ref, atol=1e-5, rtol=1e-5), (out, ref)
    # rows must sum to 1 (softmax)
    assert jnp.allclose(jnp.sum(out, axis=1), 1.0, atol=1e-5)

    print("KERNEL_OK")
</pallas_src>

<mosaic_0001>
module attributes {stable_mosaic.version = 11 : i64} {
  func.func @_titanic_mlp_kernel(%arg0: i32, %arg1: memref<8x128xf32, #tpu.memory_space<vmem>>, %arg2: memref<5x8x8xf32, #tpu.memory_space<vmem>>, %arg3: memref<2x128xf32, #tpu.memory_space<vmem>>) attributes {dimension_semantics = [#tpu.dimension_semantics<parallel>], iteration_bounds = array<i64: 1>, scalar_prefetch = 0 : i64, scratch_operands = 0 : i64, tpu.core_type = #tpu.core_type<tc>, window_params = [{transform_indices = @transform_0, window_bounds = array<i64: 8, 128>}, {pipeline_mode = #tpu.pipeline_mode<synchronous>, transform_indices = @transform_1, window_bounds = array<i64: 5, 8, 8>}, {transform_indices = @transform_2, window_bounds = array<i64: 2, 128>}]} {
    %c0 = arith.constant 0 : index
    %c0_0 = arith.constant 0 : index
    %0 = vector.load %arg1[%c0, %c0_0] : memref<8x128xf32, #tpu.memory_space<vmem>>, vector<8x128xf32>
    %c0_1 = arith.constant 0 : index
    %c0_2 = arith.constant 0 : index
    %c0_3 = arith.constant 0 : index
    %1 = vector.load %arg2[%c0_1, %c0_2, %c0_3] : memref<5x8x8xf32, #tpu.memory_space<vmem>>, vector<1x8x8xf32>
    %2 = vector.shape_cast %1 : vector<1x8x8xf32> to vector<8x8xf32>
    %cst = arith.constant dense<0.000000e+00> : vector<8x128xf32>
    %3 = tpu.matmul %2, %0, %cst {dimension_numbers = #tpu.dot_dimension_numbers<[1], [0], [0], [1], [0, 0, 1, 1], [], []>} : vector<8x8xf32>, vector<8x128xf32>, vector<8x128xf32> -> vector<8x128xf32>
    %cst_4 = arith.constant 0.000000e+00 : f32
    %4 = vector.broadcast %cst_4 : f32 to vector<8x128xf32>
    %5 = arith.maximumf %3, %4 : vector<8x128xf32>
    %c1 = arith.constant 1 : index
    %c0_5 = arith.constant 0 : index
    %c0_6 = arith.constant 0 : index
    %6 = vector.load %arg2[%c1, %c0_5, %c0_6] : memref<5x8x8xf32, #tpu.memory_space<vmem>>, vector<1x8x8xf32>
    %7 = vector.shape_cast %6 : vector<1x8x8xf32> to vector<8x8xf32>
    %cst_7 = arith.constant dense<0.000000e+00> : vector<8x128xf32>
    %8 = tpu.matmul %7, %5, %cst_7 {dimension_numbers = #tpu.dot_dimension_numbers<[1], [0], [0], [1], [0, 0, 1, 1], [], []>} : vector<8x8xf32>, vector<8x128xf32>, vector<8x128xf32> -> vector<8x128xf32>
    %cst_8 = arith.constant 0.000000e+00 : f32
    %9 = vector.broadcast %cst_8 : f32 to vector<8x128xf32>
    %10 = arith.maximumf %8, %9 : vector<8x128xf32>
    %c2 = arith.constant 2 : index
    %c0_9 = arith.constant 0 : index
    %c0_10 = arith.constant 0 : index
    %11 = vector.load %arg2[%c2, %c0_9, %c0_10] : memref<5x8x8xf32, #tpu.memory_space<vmem>>, vector<1x8x8xf32>
    %12 = vector.shape_cast %11 : vector<1x8x8xf32> to vector<8x8xf32>
    %cst_11 = arith.constant dense<0.000000e+00> : vector<8x128xf32>
    %13 = tpu.matmul %12, %10, %cst_11 {dimension_numbers = #tpu.dot_dimension_numbers<[1], [0], [0], [1], [0, 0, 1, 1], [], []>} : vector<8x8xf32>, vector<8x128xf32>, vector<8x128xf32> -> vector<8x128xf32>
    %cst_12 = arith.constant 0.000000e+00 : f32
    %14 = vector.broadcast %cst_12 : f32 to vector<8x128xf32>
    %15 = arith.maximumf %13, %14 : vector<8x128xf32>
    %c3 = arith.constant 3 : index
    %c0_13 = arith.constant 0 : index
    %c0_14 = arith.constant 0 : index
    %16 = vector.load %arg2[%c3, %c0_13, %c0_14] : memref<5x8x8xf32, #tpu.memory_space<vmem>>, vector<1x8x8xf32>
    %17 = vector.shape_cast %16 : vector<1x8x8xf32> to vector<8x8xf32>
    %cst_15 = arith.constant dense<0.000000e+00> : vector<8x128xf32>
    %18 = tpu.matmul %17, %15, %cst_15 {dimension_numbers = #tpu.dot_dimension_numbers<[1], [0], [0], [1], [0, 0, 1, 1], [], []>} : vector<8x8xf32>, vector<8x128xf32>, vector<8x128xf32> -> vector<8x128xf32>
    %cst_16 = arith.constant 0.000000e+00 : f32
    %19 = vector.broadcast %cst_16 : f32 to vector<8x128xf32>
    %20 = arith.maximumf %18, %19 : vector<8x128xf32>
    %c4 = arith.constant 4 : index
    %c0_17 = arith.constant 0 : index
    %c0_18 = arith.constant 0 : index
    %21 = vector.load %arg2[%c4, %c0_17, %c0_18] : memref<5x8x8xf32, #tpu.memory_space<vmem>>, vector<1x8x8xf32>
    %22 = vector.shape_cast %21 : vector<1x8x8xf32> to vector<8x8xf32>
    %cst_19 = arith.constant dense<0.000000e+00> : vector<8x128xf32>
    %23 = tpu.matmul %22, %20, %cst_19 {dimension_numbers = #tpu.dot_dimension_numbers<[1], [0], [0], [1], [0, 0, 1, 1], [], []>} : vector<8x8xf32>, vector<8x128xf32>, vector<8x128xf32> -> vector<8x128xf32>
    %24 = vector.extract_strided_slice %23 {offsets = [0, 0], sizes = [1, 128], strides = [1, 1]} : vector<8x128xf32> to vector<1x128xf32>
    %25 = arith.negf %24 : vector<1x128xf32>
    %26 = math.exp %25 : vector<1x128xf32>
    %cst_20 = arith.constant 1.000000e+00 : f32
    %27 = vector.broadcast %cst_20 : f32 to vector<1x128xf32>
    %28 = arith.addf %27, %26 : vector<1x128xf32>
    %29 = arith.divf %27, %28 : vector<1x128xf32>
    %c0_21 = arith.constant 0 : index
    %c0_22 = arith.constant 0 : index
    %30 = vector.load %arg3[%c0_21, %c0_22] : memref<2x128xf32, #tpu.memory_space<vmem>>, vector<1x128xf32>
    tpu.vector_store %arg3[%c0_21, %c0_22], %29 {strides = array<i32>} : memref<2x128xf32, #tpu.memory_space<vmem>>, vector<1x128xf32>,
    %cst_23 = arith.constant 1.000000e+00 : f32
    %31 = vector.broadcast %cst_23 : f32 to vector<1x128xf32>
    %32 = arith.subf %31, %29 : vector<1x128xf32>
    %c1_24 = arith.constant 1 : index
    %c0_25 = arith.constant 0 : index
    %33 = vector.load %arg3[%c1_24, %c0_25] : memref<2x128xf32, #tpu.memory_space<vmem>>, vector<1x128xf32>
    tpu.vector_store %arg3[%c1_24, %c0_25], %32 {strides = array<i32>} : memref<2x128xf32, #tpu.memory_space<vmem>>, vector<1x128xf32>,
    return
  }
  func.func @transform_0(%arg0: i32) -> (i32, i32) {
    %c0_i32 = arith.constant 0 : i32
    %c0_i32_0 = arith.constant 0 : i32
    return %c0_i32, %arg0 : i32, i32
  }
  func.func @transform_1(%arg0: i32) -> (i32, i32, i32) {
    %c0_i32 = arith.constant 0 : i32
    %c0_i32_0 = arith.constant 0 : i32
    %c0_i32_1 = arith.constant 0 : i32
    %c0_i32_2 = arith.constant 0 : i32
    return %c0_i32, %c0_i32_0, %c0_i32_1 : i32, i32, i32
  }
  func.func @transform_2(%arg0: i32) -> (i32, i32) {
    %c0_i32 = arith.constant 0 : i32
    %c0_i32_0 = arith.constant 0 : i32
    return %c0_i32, %arg0 : i32, i32
  }
}

</mosaic_0001>

<llo_original>
// kernel: tpu_custom_call.1
$region0: #{tpu_custom_call.1}
  #allocation0 [shape = 'u32[]', space=smem, size = 0x4, offset = 0x4, fixed_abs, tag = 'smem constant byte address 0x4 - core index']
  #allocation1 [shape = 'u32[144,128]{1,0:T(1,128)}', space=vmem, size = 0x12000, scoped, tag = 'internal scratch']
  %s0 = inlined_call_operand.hbm [shape: f32[8,128], index: 0, kind: input, shape index: {}]
  %s1 = inlined_call_operand.hbm [shape: f32[5,8,8], index: 1, kind: input, shape index: {}]
  %s2 = inlined_call_operand.hbm [shape: f32[2,128], index: 2, kind: output, shape index: {}]
  %s3 = sld [smem:[#allocation0]]
  $region26: #{tpu_custom_call.1} parent=0
    _
  %s5 = ssub.s32 1, %s3
  %s6 = scalar_select 0, %s5, %s3
  $region1: #{tpu_custom_call.1} parent=0
    #allocation2 [shape = 'u8[4096]{0}', space=vmem, size = 0x1000, scoped, tag = 'input window, operand 0, single buffered']
    #allocation3 [shape = 's32[1]{0}', space=sflag, size = 0x4, scoped, tag = 'scoped memory for tpu_custom_call.1']
    #allocation4 [shape = 's32[1]{0}', space=sflag, size = 0x4, scoped, tag = 'scoped memory for tpu_custom_call.1']
    #allocation5 [shape = 'u8[20480]{0}', space=vmem, size = 0x5000, scoped, tag = 'input window, operand 1, single buffered']
    #allocation6 [shape = 's32[1]{0}', space=sflag, size = 0x4, scoped, tag = 'scoped memory for tpu_custom_call.1']
    #allocation7 [shape = 'u8[1024]{0}', space=vmem, size = 0x400, scoped, tag = 'output window, operand 0, single buffered']
    %7 = vsyncpa [#allocation3], 0
    %8 = vsyncpa [#allocation6], 0
    %9 = vsyncpa [#allocation4], 0
    // Predicated region
    $region2: #{tpu_custom_call.1} parent=1 // pred_check
      _
    $region3: #{tpu_custom_call.1} parent=1 // pred_check_branch
      %11 = sbr.rel (0) target = $region5
    $region4: #{tpu_custom_call.1} parent=1 // pred_region
      %s13 = ssub.s32 128, 128
      %14 = vsyncadd [#allocation3], %s13
      %s16 = sshll.u32 [#allocation2], 4
      %s17 = int_to_ptr.vmem [resolvable:$true] %s16
      %19 = dma.hbm_to_vmem [thread:$0]  %s0, 128, %s17, [#allocation3]
    $region5: #{tpu_custom_call.1} parent=1 // pred_fallthru
      _
    // Predicated region
    $region6: #{tpu_custom_call.1} parent=1 // pred_check
      _
    $region7: #{tpu_custom_call.1} parent=1 // pred_check_branch
      %21 = sbr.rel (0) target = $region9
    $region8: #{tpu_custom_call.1} parent=1 // pred_region
      %s23 = ssub.s32 640, 640
      %24 = vsyncadd [#allocation6], %s23
      %s25 = sshll.u32 [#allocation5], 4
      %s26 = int_to_ptr.vmem [resolvable:$true] %s25
      %31 = dma.hbm_to_vmem [thread:$0]  %s1, 640, %s26, [#allocation6], 128, 128, 8
    $region9: #{tpu_custom_call.1} parent=1 // pred_fallthru
      _
    // Predicated region
    $region10: #{tpu_custom_call.1} parent=1 // pred_check
      _
    $region11: #{tpu_custom_call.1} parent=1 // pred_check_branch
      %33 = sbr.rel (0) target = $region13
    $region12: #{tpu_custom_call.1} parent=1 // pred_region
      %34 = dma.done [#allocation3], 128
    $region13: #{tpu_custom_call.1} parent=1 // pred_fallthru
      _
    // Predicated region
    $region14: #{tpu_custom_call.1} parent=1 // pred_check
      _
    $region15: #{tpu_custom_call.1} parent=1 // pred_check_branch
      %36 = sbr.rel (0) target = $region17
    $region16: #{tpu_custom_call.1} parent=1 // pred_region
      %37 = dma.done [#allocation6], 640
    $region17: #{tpu_custom_call.1} parent=1 // pred_fallthru
      _
    %v38 = vld [vmem:[#allocation2] sm:$0xff]
    %v39 = vld [vmem:[#allocation5] sm:$0xff]
    %vm40 = vcmask 64512
    %v42 = vsel %vm40, %v39, 0
    %44 = vmatprep.subr.mxu0 0.0
    %45 = vmatpush1.msra.mxu0 0.0
    %46 = vmatprep.subr.mxu0 0.0
    %47 = vmatpush1.msra.mxu0 0.0
    %48 = vmatprep.subr.mxu0 0.0
    %49 = vmatpush1.msra.mxu0 0.0
    %50 = vmatprep.subr.mxu0 0.0
    %51 = vmatpush1.msra.mxu0 0.0
    %52 = vmatprep.subr.mxu0 0.0
    %53 = vmatpush1.msra.mxu0 0.0
    %54 = vmatprep.subr.mxu0 0.0
    %55 = vmatpush1.msra.mxu0 0.0
    %56 = vmatprep.subr.mxu0 0.0
    %57 = vmatpush1.msra.mxu0 0.0
    %58 = vmatprep.subr.mxu0 0.0
    %59 = vmatpush1.msra.mxu0 0.0
    %60 = vmatprep.subr.mxu0 0.0
    %61 = vmatpush1.msra.mxu0 0.0
    %62 = vmatprep.subr.mxu0 0.0
    %63 = vmatpush1.msra.mxu0 0.0
    %64 = vmatprep.subr.mxu0 0.0
    %65 = vmatpush1.msra.mxu0 0.0
    %66 = vmatprep.subr.mxu0 0.0
    %67 = vmatpush1.msra.mxu0 0.0
    %68 = vmatprep.subr.mxu0 0.0
    %69 = vmatpush1.msra.mxu0 0.0
    %70 = vmatprep.subr.mxu0 0.0
    %71 = vmatpush1.msra.mxu0 0.0
    %72 = vmatprep.subr.mxu0 0.0
    %73 = vmatpush1.msra.mxu0 0.0
    %74 = vmatprep.subr.mxu0 0.0
    %75 = vmatpush1.msra.mxu0 %v38
    %76 = vmatprep.subr.mxu0 0.0
    %77 = vmatpush2.msra.mxu0 0.0
    %78 = vmatprep.subr.mxu0 0.0
    %79 = vmatpush2.msra.mxu0 0.0
    %80 = vmatprep.subr.mxu0 0.0
    %81 = vmatpush2.msra.mxu0 0.0
    %82 = vmatprep.subr.mxu0 0.0
    %83 = vmatpush2.msra.mxu0 0.0
    %84 = vmatprep.subr.mxu0 0.0
    %85 = vmatpush2.msra.mxu0 0.0
    %86 = vmatprep.subr.mxu0 0.0
    %87 = vmatpush2.msra.mxu0 0.0
    %88 = vmatprep.subr.mxu0 0.0
    %89 = vmatpush2.msra.mxu0 0.0
    %90 = vmatprep.subr.mxu0 0.0
    %91 = vmatpush2.msra.mxu0 0.0
    %92 = vmatprep.subr.mxu0 0.0
    %93 = vmatpush2.msra.mxu0 0.0
    %94 = vmatprep.subr.mxu0 0.0
    %95 = vmatpush2.msra.mxu0 0.0
    %96 = vmatprep.subr.mxu0 0.0
    %97 = vmatpush2.msra.mxu0 0.0
    %98 = vmatprep.subr.mxu0 0.0
    %99 = vmatpush2.msra.mxu0 0.0
    %100 = vmatprep.subr.mxu0 0.0
    %101 = vmatpush2.msra.mxu0 0.0
    %102 = vmatprep.subr.mxu0 0.0
    %103 = vmatpush2.msra.mxu0 0.0
    %104 = vmatprep.subr.mxu0 0.0
    %105 = vmatpush2.msra.mxu0 0.0
    %106 = vmatprep.subr.mxu0 0.0
    %107 = vmatpush2.msra.mxu0 0.0
    %108 = vmatprep.mubr.f32.mxu0 0.0
    %109 = vmatmul.mubr.f32.gmra.mxu0 %v42
    %v110 = vpop.f32.mrf.mxu0
    %v111 = vadd.f32 0.0, %v110
    %v112 = vpop.f32.mrf.mxu0
    %113 = vdwg.mxu0
    %v114 = vmax.f32 %v111, 0.0
    %s115 = scalar_lea.vmem [#allocation5], 8
    %v116 = vld [vmem:[%s115] sm:$0xff]
    %v118 = vsel %vm40, %v116, 0
    %120 = vmatprep.subr.mxu0 0.0
    %121 = vmatpush1.msra.mxu0 0.0
    %122 = vmatprep.subr.mxu0 0.0
    %123 = vmatpush1.msra.mxu0 0.0
    %124 = vmatprep.subr.mxu0 0.0
    %125 = vmatpush1.msra.mxu0 0.0
    %126 = vmatprep.subr.mxu0 0.0
    %127 = vmatpush1.msra.mxu0 0.0
    %128 = vmatprep.subr.mxu0 0.0
    %129 = vmatpush1.msra.mxu0 0.0
    %130 = vmatprep.subr.mxu0 0.0
    %131 = vmatpush1.msra.mxu0 0.0
    %132 = vmatprep.subr.mxu0 0.0
    %133 = vmatpush1.msra.mxu0 0.0
    %134 = vmatprep.subr.mxu0 0.0
    %135 = vmatpush1.msra.mxu0 0.0
    %136 = vmatprep.subr.mxu0 0.0
    %137 = vmatpush1.msra.mxu0 0.0
    %138 = vmatprep.subr.mxu0 0.0
    %139 = vmatpush1.msra.mxu0 0.0
    %140 = vmatprep.subr.mxu0 0.0
    %141 = vmatpush1.msra.mxu0 0.0
    %142 = vmatprep.subr.mxu0 0.0
    %143 = vmatpush1.msra.mxu0 0.0
    %144 = vmatprep.subr.mxu0 0.0
    %145 = vmatpush1.msra.mxu0 0.0
    %146 = vmatprep.subr.mxu0 0.0
    %147 = vmatpush1.msra.mxu0 0.0
    %148 = vmatprep.subr.mxu0 0.0
    %149 = vmatpush1.msra.mxu0 0.0
    %150 = vmatprep.subr.mxu0 0.0
    %151 = vmatpush1.msra.mxu0 %v114
    %152 = vmatprep.subr.mxu0 0.0
    %153 = vmatpush2.msra.mxu0 0.0
    %154 = vmatprep.subr.mxu0 0.0
    %155 = vmatpush2.msra.mxu0 0.0
    %156 = vmatprep.subr.mxu0 0.0
    %157 = vmatpush2.msra.mxu0 0.0
    %158 = vmatprep.subr.mxu0 0.0
    %159 = vmatpush2.msra.mxu0 0.0
    %160 = vmatprep.subr.mxu0 0.0
    %161 = vmatpush2.msra.mxu0 0.0
    %162 = vmatprep.subr.mxu0 0.0
    %163 = vmatpush2.msra.mxu0 0.0
    %164 = vmatprep.subr.mxu0 0.0
    %165 = vmatpush2.msra.mxu0 0.0
    %166 = vmatprep.subr.mxu0 0.0
    %167 = vmatpush2.msra.mxu0 0.0
    %168 = vmatprep.subr.mxu0 0.0
    %169 = vmatpush2.msra.mxu0 0.0
    %170 = vmatprep.subr.mxu0 0.0
    %171 = vmatpush2.msra.mxu0 0.0
    %172 = vmatprep.subr.mxu0 0.0
    %173 = vmatpush2.msra.mxu0 0.0
    %174 = vmatprep.subr.mxu0 0.0
    %175 = vmatpush2.msra.mxu0 0.0
    %176 = vmatprep.subr.mxu0 0.0
    %177 = vmatpush2.msra.mxu0 0.0
    %178 = vmatprep.subr.mxu0 0.0
    %179 = vmatpush2.msra.mxu0 0.0
    %180 = vmatprep.subr.mxu0 0.0
    %181 = vmatpush2.msra.mxu0 0.0
    %182 = vmatprep.subr.mxu0 0.0
    %183 = vmatpush2.msra.mxu0 0.0
    %184 = vmatprep.mubr.f32.mxu0 0.0
    %185 = vmatmul.mubr.f32.gmra.mxu0 %v118
    %v186 = vpop.f32.mrf.mxu0
    %v187 = vadd.f32 0.0, %v186
    %v188 = vpop.f32.mrf.mxu0
    %189 = vdwg.mxu0
    %v190 = vmax.f32 %v187, 0.0
    %s191 = scalar_lea.vmem [#allocation5], 16
    %v192 = vld [vmem:[%s191] sm:$0xff]
    %v194 = vsel %vm40, %v192, 0
    %196 = vmatprep.subr.mxu0 0.0
    %197 = vmatpush1.msra.mxu0 0.0
    %198 = vmatprep.subr.mxu0 0.0
    %199 = vmatpush1.msra.mxu0 0.0
    %200 = vmatprep.subr.mxu0 0.0
    %201 = vmatpush1.msra.mxu0 0.0
    %202 = vmatprep.subr.mxu0 0.0
    %203 = vmatpush1.msra.mxu0 0.0
    %204 = vmatprep.subr.mxu0 0.0
    %205 = vmatpush1.msra.mxu0 0.0
    %206 = vmatprep.subr.mxu0 0.0
    %207 = vmatpush1.msra.mxu0 0.0
    %208 = vmatprep.subr.mxu0 0.0
    %209 = vmatpush1.msra.mxu0 0.0
    %210 = vmatprep.subr.mxu0 0.0
    %211 = vmatpush1.msra.mxu0 0.0
    %212 = vmatprep.subr.mxu0 0.0
    %213 = vmatpush1.msra.mxu0 0.0
    %214 = vmatprep.subr.mxu0 0.0
    %215 = vmatpush1.msra.mxu0 0.0
    %216 = vmatprep.subr.mxu0 0.0
    %217 = vmatpush1.msra.mxu0 0.0
    %218 = vmatprep.subr.mxu0 0.0
    %219 = vmatpush1.msra.mxu0 0.0
    %220 = vmatprep.subr.mxu0 0.0
    %221 = vmatpush1.msra.mxu0 0.0
    %222 = vmatprep.subr.mxu0 0.0
    %223 = vmatpush1.msra.mxu0 0.0
    %224 = vmatprep.subr.mxu0 0.0
    %225 = vmatpush1.msra.mxu0 0.0
    %226 = vmatprep.subr.mxu0 0.0
    %227 = vmatpush1.msra.mxu0 %v190
    %228 = vmatprep.subr.mxu0 0.0
    %229 = vmatpush2.msra.mxu0 0.0
    %230 = vmatprep.subr.mxu0 0.0
    %231 = vmatpush2.msra.mxu0 0.0
    %232 = vmatprep.subr.mxu0 0.0
    %233 = vmatpush2.msra.mxu0 0.0
    %234 = vmatprep.subr.mxu0 0.0
    %235 = vmatpush2.msra.mxu0 0.0
    %236 = vmatprep.subr.mxu0 0.0
    %237 = vmatpush2.msra.mxu0 0.0
    %238 = vmatprep.subr.mxu0 0.0
    %239 = vmatpush2.msra.mxu0 0.0
    %240 = vmatprep.subr.mxu0 0.0
    %241 = vmatpush2.msra.mxu0 0.0
    %242 = vmatprep.subr.mxu0 0.0
    %243 = vmatpush2.msra.mxu0 0.0
    %244 = vmatprep.subr.mxu0 0.0
    %245 = vmatpush2.msra.mxu0 0.0
    %246 = vmatprep.subr.mxu0 0.0
    %247 = vmatpush2.msra.mxu0 0.0
    %248 = vmatprep.subr.mxu0 0.0
    %249 = vmatpush2.msra.mxu0 0.0
    %250 = vmatprep.subr.mxu0 0.0
    %251 = vmatpush2.msra.mxu0 0.0
    %252 = vmatprep.subr.mxu0 0.0
    %253 = vmatpush2.msra.mxu0 0.0
    %254 = vmatprep.subr.mxu0 0.0
    %255 = vmatpush2.msra.mxu0 0.0
    %256 = vmatprep.subr.mxu0 0.0
    %257 = vmatpush2.msra.mxu0 0.0
    %258 = vmatprep.subr.mxu0 0.0
    %259 = vmatpush2.msra.mxu0 0.0
    %260 = vmatprep.mubr.f32.mxu0 0.0
    %261 = vmatmul.mubr.f32.gmra.mxu0 %v194
    %v262 = vpop.f32.mrf.mxu0
    %v263 = vadd.f32 0.0, %v262
    %v264 = vpop.f32.mrf.mxu0
    %265 = vdwg.mxu0
    %v266 = vmax.f32 %v263, 0.0
    %s267 = scalar_lea.vmem [#allocation5], 24
    %v268 = vld [vmem:[%s267] sm:$0xff]
    %v270 = vsel %vm40, %v268, 0
    %272 = vmatprep.subr.mxu0 0.0
    %273 = vmatpush1.msra.mxu0 0.0
    %274 = vmatprep.subr.mxu0 0.0
    %275 = vmatpush1.msra.mxu0 0.0
    %276 = vmatprep.subr.mxu0 0.0
    %277 = vmatpush1.msra.mxu0 0.0
    %278 = vmatprep.subr.mxu0 0.0
    %279 = vmatpush1.msra.mxu0 0.0
    %280 = vmatprep.subr.mxu0 0.0
    %281 = vmatpush1.msra.mxu0 0.0
    %282 = vmatprep.subr.mxu0 0.0
    %283 = vmatpush1.msra.mxu0 0.0
    %284 = vmatprep.subr.mxu0 0.0
    %285 = vmatpush1.msra.mxu0 0.0
    %286 = vmatprep.subr.mxu0 0.0
    %287 = vmatpush1.msra.mxu0 0.0
    %288 = vmatprep.subr.mxu0 0.0
    %289 = vmatpush1.msra.mxu0 0.0
    %290 = vmatprep.subr.mxu0 0.0
    %291 = vmatpush1.msra.mxu0 0.0
    %292 = vmatprep.subr.mxu0 0.0
    %293 = vmatpush1.msra.mxu0 0.0
    %294 = vmatprep.subr.mxu0 0.0
    %295 = vmatpush1.msra.mxu0 0.0
    %296 = vmatprep.subr.mxu0 0.0
    %297 = vmatpush1.msra.mxu0 0.0
    %298 = vmatprep.subr.mxu0 0.0
    %299 = vmatpush1.msra.mxu0 0.0
    %300 = vmatprep.subr.mxu0 0.0
    %301 = vmatpush1.msra.mxu0 0.0
    %302 = vmatprep.subr.mxu0 0.0
    %303 = vmatpush1.msra.mxu0 %v266
    %304 = vmatprep.subr.mxu0 0.0
    %305 = vmatpush2.msra.mxu0 0.0
    %306 = vmatprep.subr.mxu0 0.0
    %307 = vmatpush2.msra.mxu0 0.0
    %308 = vmatprep.subr.mxu0 0.0
    %309 = vmatpush2.msra.mxu0 0.0
    %310 = vmatprep.subr.mxu0 0.0
    %311 = vmatpush2.msra.mxu0 0.0
    %312 = vmatprep.subr.mxu0 0.0
    %313 = vmatpush2.msra.mxu0 0.0
    %314 = vmatprep.subr.mxu0 0.0
    %315 = vmatpush2.msra.mxu0 0.0
    %316 = vmatprep.subr.mxu0 0.0
    %317 = vmatpush2.msra.mxu0 0.0
    %318 = vmatprep.subr.mxu0 0.0
    %319 = vmatpush2.msra.mxu0 0.0
    %320 = vmatprep.subr.mxu0 0.0
    %321 = vmatpush2.msra.mxu0 0.0
    %322 = vmatprep.subr.mxu0 0.0
    %323 = vmatpush2.msra.mxu0 0.0
    %324 = vmatprep.subr.mxu0 0.0
    %325 = vmatpush2.msra.mxu0 0.0
    %326 = vmatprep.subr.mxu0 0.0
    %327 = vmatpush2.msra.mxu0 0.0
    %328 = vmatprep.subr.mxu0 0.0
    %329 = vmatpush2.msra.mxu0 0.0
    %330 = vmatprep.subr.mxu0 0.0
    %331 = vmatpush2.msra.mxu0 0.0
    %332 = vmatprep.subr.mxu0 0.0
    %333 = vmatpush2.msra.mxu0 0.0
    %334 = vmatprep.subr.mxu0 0.0
    %335 = vmatpush2.msra.mxu0 0.0
    %336 = vmatprep.mubr.f32.mxu0 0.0
    %337 = vmatmul.mubr.f32.gmra.mxu0 %v270
    %v338 = vpop.f32.mrf.mxu0
    %v339 = vadd.f32 0.0, %v338
    %v340 = vpop.f32.mrf.mxu0
    %341 = vdwg.mxu0
    %v342 = vmax.f32 %v339, 0.0
    %s343 = scalar_lea.vmem [#allocation5], 32
    %v344 = vld [vmem:[%s343] sm:$0xff]
    %v346 = vsel %vm40, %v344, 0
    %348 = vmatprep.subr.mxu0 0.0
    %349 = vmatpush1.msra.mxu0 0.0
    %350 = vmatprep.subr.mxu0 0.0
    %351 = vmatpush1.msra.mxu0 0.0
    %352 = vmatprep.subr.mxu0 0.0
    %353 = vmatpush1.msra.mxu0 0.0
    %354 = vmatprep.subr.mxu0 0.0
    %355 = vmatpush1.msra.mxu0 0.0
    %356 = vmatprep.subr.mxu0 0.0
    %357 = vmatpush1.msra.mxu0 0.0
    %358 = vmatprep.subr.mxu0 0.0
    %359 = vmatpush1.msra.mxu0 0.0
    %360 = vmatprep.subr.mxu0 0.0
    %361 = vmatpush1.msra.mxu0 0.0
    %362 = vmatprep.subr.mxu0 0.0
    %363 = vmatpush1.msra.mxu0 0.0
    %364 = vmatprep.subr.mxu0 0.0
    %365 = vmatpush1.msra.mxu0 0.0
    %366 = vmatprep.subr.mxu0 0.0
    %367 = vmatpush1.msra.mxu0 0.0
    %368 = vmatprep.subr.mxu0 0.0
    %369 = vmatpush1.msra.mxu0 0.0
    %370 = vmatprep.subr.mxu0 0.0
    %371 = vmatpush1.msra.mxu0 0.0
    %372 = vmatprep.subr.mxu0 0.0
    %373 = vmatpush1.msra.mxu0 0.0
    %374 = vmatprep.subr.mxu0 0.0
    %375 = vmatpush1.msra.mxu0 0.0
    %376 = vmatprep.subr.mxu0 0.0
    %377 = vmatpush1.msra.mxu0 0.0
    %378 = vmatprep.subr.mxu0 0.0
    %379 = vmatpush1.msra.mxu0 %v342
    %380 = vmatprep.subr.mxu0 0.0
    %381 = vmatpush2.msra.mxu0 0.0
    %382 = vmatprep.subr.mxu0 0.0
    %383 = vmatpush2.msra.mxu0 0.0
    %384 = vmatprep.subr.mxu0 0.0
    %385 = vmatpush2.msra.mxu0 0.0
    %386 = vmatprep.subr.mxu0 0.0
    %387 = vmatpush2.msra.mxu0 0.0
    %388 = vmatprep.subr.mxu0 0.0
    %389 = vmatpush2.msra.mxu0 0.0
    %390 = vmatprep.subr.mxu0 0.0
    %391 = vmatpush2.msra.mxu0 0.0
    %392 = vmatprep.subr.mxu0 0.0
    %393 = vmatpush2.msra.mxu0 0.0
    %394 = vmatprep.subr.mxu0 0.0
    %395 = vmatpush2.msra.mxu0 0.0
    %396 = vmatprep.subr.mxu0 0.0
    %397 = vmatpush2.msra.mxu0 0.0
    %398 = vmatprep.subr.mxu0 0.0
    %399 = vmatpush2.msra.mxu0 0.0
    %400 = vmatprep.subr.mxu0 0.0
    %401 = vmatpush2.msra.mxu0 0.0
    %402 = vmatprep.subr.mxu0 0.0
    %403 = vmatpush2.msra.mxu0 0.0
    %404 = vmatprep.subr.mxu0 0.0
    %405 = vmatpush2.msra.mxu0 0.0
    %406 = vmatprep.subr.mxu0 0.0
    %407 = vmatpush2.msra.mxu0 0.0
    %408 = vmatprep.subr.mxu0 0.0
    %409 = vmatpush2.msra.mxu0 0.0
    %410 = vmatprep.subr.mxu0 0.0
    %411 = vmatpush2.msra.mxu0 0.0
    %412 = vmatprep.mubr.f32.mxu0 0.0
    %413 = vmatmul.mubr.f32.gmra.mxu0 %v346
    %v414 = vpop.f32.mrf.mxu0
    %v415 = vadd.f32 0.0, %v414
    %v416 = vpop.f32.mrf.mxu0
    %417 = vdwg.mxu0
    %v418 = vxor.u32 %v415, 2147483648
    %v419 = vmul.f32 %v418, 1.442695
    %v420 = vpow.pop %v419
    %v421 = vadd.f32 %v420, 1.0
    %v422 = vrcp.pop %v421
    %v423 = vmul.f32 1.0, %v422
    %424 = vst [vmem:[#allocation7] sm:$0x1] %v423
    %v425 = vsub.f32 1.0, %v423
    %426 = vst [vmem:[#allocation7 + $0x1] sm:$0x1] %v425
    // Predicated region
    $region18: #{tpu_custom_call.1} parent=1 // pred_check
      _
    $region19: #{tpu_custom_call.1} parent=1 // pred_check_branch
      %428 = sbr.rel (0) target = $region21
    $region20: #{tpu_custom_call.1} parent=1 // pred_region
      %s430 = ssub.s32 32, 32
      %431 = vsyncadd [#allocation4], %s430
      %s433 = sshll.u32 [#allocation7], 4
      %s434 = int_to_ptr.vmem [resolvable:$true] %s433
      %436 = dma.vmem_to_hbm [thread:$0]  %s434, 32, %s2, [#allocation4]
    $region21: #{tpu_custom_call.1} parent=1 // pred_fallthru
      _
    // Predicated region
    $region22: #{tpu_custom_call.1} parent=1 // pred_check
      _
    $region23: #{tpu_custom_call.1} parent=1 // pred_check_branch
      %438 = sbr.rel (0) target = $region25
    $region24: #{tpu_custom_call.1} parent=1 // pred_region
      %439 = dma.done [#allocation4], 32
    $region25: #{tpu_custom_call.1} parent=1 // pred_fallthru
      _
    %440 = vsyncpa [#allocation3], 1
    %441 = vsyncpa [#allocation6], 1
    %442 = vsyncpa [#allocation4], 1

</llo_original>
